<compile_context>
chip_gen: v7x
topology: tpu7x:2x2x1
jax: 0.10.0
libtpu: 0.0.40
codegen_flags: <defaults>
</compile_context>

<pallas_src>
import functools

import jax
import jax.numpy as jnp
from jax.experimental import pallas as pl
from jax.experimental.pallas import tpu as pltpu


# ----------------------------- Kernel 1: pooling -----------------------------
def _pool_kernel(x_ref, max_ref, avg_ref, max_acc, sum_acc, *,
                 hw, hw_tile, c_blk, needs_mask):
    """Streaming per-channel max / avg pooling over the flattened HW axis."""
    s = pl.program_id(2)
    n_s = pl.num_programs(2)

    # [C_blk, HW_TILE]; upcast so bf16 inputs accumulate in f32.
    x = x_ref[0].astype(jnp.float32)

    def _accumulate(tile_max, tile_sum):
        # Init folded into step 0: no separate -inf/zeros pass and no extra
        # scratch read-modify-write on the first step.
        @pl.when(s == 0)
        def _():
            max_acc[...] = tile_max
            sum_acc[...] = tile_sum

        @pl.when(s != 0)
        def _():
            max_acc[...] = jnp.maximum(max_acc[...], tile_max)
            sum_acc[...] = sum_acc[...] + tile_sum

    if needs_mask:
        # Only the last HW step has a padded tail -> keep the iota/compare/
        # select work off every hot step.
        is_last = s == n_s - 1

        @pl.when(is_last)
        def _():
            lane = jax.lax.broadcasted_iota(jnp.int32, (c_blk, hw_tile), 1)
            valid = (s * hw_tile + lane) < hw
            xm = jnp.where(valid, x, -jnp.inf)   # padded lanes never win max
            xs = jnp.where(valid, x, 0.0)        # padded lanes add nothing
            _accumulate(jnp.max(xm, axis=-1, keepdims=True),
                        jnp.sum(xs, axis=-1, keepdims=True))

        @pl.when(jnp.logical_not(is_last))
        def _():
            _accumulate(jnp.max(x, axis=-1, keepdims=True),
                        jnp.sum(x, axis=-1, keepdims=True))
    else:
        _accumulate(jnp.max(x, axis=-1, keepdims=True),
                    jnp.sum(x, axis=-1, keepdims=True))

    @pl.when(s == n_s - 1)
    def _finalize():
        max_ref[0] = max_acc[...]
        avg_ref[0] = sum_acc[...] * jnp.float32(1.0 / hw)


# ------------------------ Kernel 2: shared MLP + gate ------------------------
def _mlp_gate_kernel(mx_ref, av_ref, w1t_ref, b1_ref, w2t_ref, b2_ref, gate_ref):
    """gate = sigmoid(MLP(max_pool) + MLP(avg_pool)), batched over N images."""
    w1t = w1t_ref[...]   # [C, hidden]
    b1 = b1_ref[...]     # [1, hidden]
    w2t = w2t_ref[...]   # [hidden, C]
    b2 = b2_ref[...]     # [1, C]

    def mlp(v):          # v: [N, C]
        h = jnp.dot(v, w1t, preferred_element_type=jnp.float32) + b1
        h = jnp.maximum(h, 0.0)
        return jnp.dot(h, w2t, preferred_element_type=jnp.float32) + b2

    logits = mlp(mx_ref[...]) + mlp(av_ref[...])
    gate_ref[...] = jax.nn.sigmoid(logits)   # lane-dense [N, C] store


# --------------------------------- Wrapper -----------------------------------
def _vmem_capacity_bytes():
    try:
        cap = int(pltpu.get_tpu_info().vmem_capacity_bytes)
        if cap > 0:
            return cap
    except Exception:
        pass
    return 64 << 20   # conservative fallback (v7x per-TensorCore)


def _choose_hw_tile(hw, c_blk, itemsize, *, max_hw_tile, stream_budget_bytes):
    """Widest HW tile (multiple of 128) fitting the double-buffered budget.

    Prefer a divisor of HW (no masked tail) only if it is at least half of
    the widest candidate; otherwise take the widest tile and mask the tail.
    Never collapses below 128.
    """
    by_budget = stream_budget_bytes // max(1, 2 * c_blk * itemsize)
    cap = min(int(max_hw_tile), int(by_budget))
    cap = max(128, (cap // 128) * 128)
    if hw <= cap:
        return hw                               # single full-extent block
    t = cap
    while t >= max(128, cap // 2):
        if hw % t == 0:
            return t                            # tail-free tile
        t -= 128
    return cap                                  # masked tail on last step


def channel_attention_forward(x, w1, b1, w2, b2, *, max_hw_tile=8192):
    """CBAM channel-attention gate.  x: [N, C, H, W] -> gate [N, C, 1, 1] f32.

    Weights in PyTorch orientation: w1 [C//16, C], b1 [C//16],
    w2 [C, C//16], b2 [C].
    """
    n, c, h, w = x.shape
    hw = h * w
    hidden = w1.shape[0]
    x_flat = x.reshape(n, c, hw)
    itemsize = x_flat.dtype.itemsize

    # Megacore: when N is odd (batch-1 inference on v7x) split channels into
    # two "parallel" blocks so the second TensorCore has work.  Single-TC
    # chips simply iterate the extra axis.
    c_blocks = 2 if (n % 2 == 1 and c % 16 == 0) else 1
    c_blk = c // c_blocks

    # VMEM: ~3/4 of physical capacity (~48 MiB on v7x, ~96 MiB on v5e/v6e),
    # almost all of it for the double-buffered x stream.
    vmem_cap = _vmem_capacity_bytes()
    usable = min((vmem_cap * 3) // 4, vmem_cap - (8 << 20))
    usable = max(usable, 16 << 20)
    stream_budget = max(usable - (4 << 20), 8 << 20)

    hw_tile = _choose_hw_tile(hw, c_blk, itemsize,
                              max_hw_tile=max_hw_tile,
                              stream_budget_bytes=stream_budget)
    n_hw_steps = pl.cdiv(hw, hw_tile)
    needs_mask = (hw % hw_tile) != 0

    pool_kernel = functools.partial(
        _pool_kernel, hw=hw, hw_tile=hw_tile, c_blk=c_blk,
        needs_mask=needs_mask)

    vmem_budget = (2 * c_blk * hw_tile * itemsize   # double-buffered x stream
                   + 8 * c_blk * 128 * 4            # padded scratch + outputs
                   + (2 << 20))                     # headroom
    vmem_limit = int(min(max(vmem_budget, 16 << 20), usable))

    max_p, avg_p = pl.pallas_call(
        pool_kernel,
        out_shape=(jax.ShapeDtypeStruct((n, c, 1), jnp.float32),
                   jax.ShapeDtypeStruct((n, c, 1), jnp.float32)),
        grid_spec=pltpu.PrefetchScalarGridSpec(
            num_scalar_prefetch=0,
            grid=(n, c_blocks, n_hw_steps),
            in_specs=[
                pl.BlockSpec((1, c_blk, hw_tile),
                             lambda ni, ci, si: (ni, ci, si)),
            ],
            out_specs=(
                pl.BlockSpec((1, c_blk, 1), lambda ni, ci, si: (ni, ci, 0)),
                pl.BlockSpec((1, c_blk, 1), lambda ni, ci, si: (ni, ci, 0)),
            ),
            scratch_shapes=[
                pltpu.VMEM((c_blk, 1), jnp.float32),  # running per-channel max
                pltpu.VMEM((c_blk, 1), jnp.float32),  # running per-channel sum
            ],
        ),
        compiler_params=pltpu.CompilerParams(
            dimension_semantics=("parallel", "parallel", "arbitrary"),
            vmem_limit_bytes=vmem_limit,
        ),
    )(x_flat)

    # Batched shared-MLP + sigmoid for all N images in one tiny kernel
    # (row-form matmuls on the MXU, lane-dense gate output).
    mx = max_p.reshape(n, c)
    av = avg_p.reshape(n, c)
    w1t = w1.astype(jnp.float32).T                  # [C, hidden]
    w2t = w2.astype(jnp.float32).T                  # [hidden, C]
    b1_row = b1.astype(jnp.float32).reshape(1, hidden)
    b2_row = b2.astype(jnp.float32).reshape(1, c)

    gate = pl.pallas_call(
        _mlp_gate_kernel,
        out_shape=jax.ShapeDtypeStruct((n, c), jnp.float32),
    )(mx, av, w1t, b1_row, w2t, b2_row)

    return gate.reshape(n, c, 1, 1)


# ------------------------------ Test utilities -------------------------------
def make_params(key, in_planes):
    """nn.Linear(in, in//16) + nn.Linear(in//16, in), PyTorch [out, in] layout."""
    hidden = in_planes // 16
    k1, k2, k3, k4 = jax.random.split(key, 4)
    w1 = jax.random.normal(k1, (hidden, in_planes), jnp.float32) * 0.1
    b1 = jax.random.normal(k2, (hidden,), jnp.float32) * 0.1
    w2 = jax.random.normal(k3, (in_planes, hidden), jnp.float32) * 0.1
    b2 = jax.random.normal(k4, (in_planes,), jnp.float32) * 0.1
    return w1, b1, w2, b2


def reference_forward(x, w1, b1, w2, b2):
    """Pure-JAX reference replicating the PyTorch forward."""
    max_p = jnp.max(x, axis=(2, 3))   # [N, C]
    avg_p = jnp.mean(x, axis=(2, 3))  # [N, C]

    def mlp(v):
        return jnp.maximum(v @ w1.T + b1, 0.0) @ w2.T + b2

    out = jax.nn.sigmoid(mlp(max_p) + mlp(avg_p))
    return out[:, :, None, None]


def _check(out, ref, name):
    assert out.shape == ref.shape, (name, out.shape, ref.shape)
    err = float(jnp.max(jnp.abs(out - ref)))
    assert jnp.allclose(out, ref, atol=2e-5, rtol=2e-5), (name, err)


if __name__ == "__main__":
    key = jax.random.PRNGKey(0)
    kx1, kx2, kx3, kp = jax.random.split(key, 4)

    # in_planes must be >= 16 (ratio=16) so the hidden layer is non-empty.
    N, C, H, W = 2, 32, 16, 16
    w1, b1, w2, b2 = make_params(kp, C)

    # Case 1: multi-step HW reduction (256 / 128 = 2 steps), no masked tail.
    x1 = jax.random.normal(kx1, (N, C, H, W), jnp.float32)
    out1 = jax.block_until_ready(
        channel_attention_forward(x1, w1, b1, w2, b2, max_hw_tile=128))
    _check(out1, reference_forward(x1, w1, b1, w2, b2), "case1")

    # Case 2: masked (padded) last HW tile: HW=300, tile=128 -> 3 steps.
    x2 = jax.random.normal(kx2, (N, C, 20, 15), jnp.float32)
    out2 = jax.block_until_ready(
        channel_attention_forward(x2, w1, b1, w2, b2, max_hw_tile=128))
    _check(out2, reference_forward(x2, w1, b1, w2, b2), "case2")

    # Case 3: N=1 -> channel-split "parallel" axis (megacore path), single tile.
    x3 = jax.random.normal(kx3, (1, C, H, W), jnp.float32)
    out3 = jax.block_until_ready(
        channel_attention_forward(x3, w1, b1, w2, b2))
    _check(out3, reference_forward(x3, w1, b1, w2, b2), "case3")

    print("KERNEL_OK")
</pallas_src>

<mosaic_0001>
module attributes {stable_mosaic.version = 11 : i64} {
  func.func @_pool_kernel(%arg0: i32, %arg1: i32, %arg2: i32, %arg3: memref<1x32x128xf32, #tpu.memory_space<vmem>>, %arg4: memref<1x32x1xf32, #tpu.memory_space<vmem>>, %arg5: memref<1x32x1xf32, #tpu.memory_space<vmem>>, %arg6: memref<32x1xf32, #tpu.memory_space<vmem>>, %arg7: memref<32x1xf32, #tpu.memory_space<vmem>>) attributes {dimension_semantics = [#tpu.dimension_semantics<parallel>, #tpu.dimension_semantics<parallel>, #tpu.dimension_semantics<arbitrary>], iteration_bounds = array<i64: 2, 1, 2>, scalar_prefetch = 0 : i64, scratch_operands = 2 : i64, tpu.core_type = #tpu.core_type<tc>, window_params = [{transform_indices = @transform_0, window_bounds = array<i64: 1, 32, 128>}, {transform_indices = @transform_1, window_bounds = array<i64: 1, 32, 1>}, {transform_indices = @transform_2, window_bounds = array<i64: 1, 32, 1>}]} {
    %c0 = arith.constant 0 : index
    %c0_0 = arith.constant 0 : index
    %c0_1 = arith.constant 0 : index
    %0 = vector.load %arg3[%c0, %c0_0, %c0_1] : memref<1x32x128xf32, #tpu.memory_space<vmem>>, vector<1x32x128xf32>
    %1 = vector.shape_cast %0 : vector<1x32x128xf32> to vector<32x128xf32>
    %cst = arith.constant dense<0xFF800000> : vector<32xf32>
    %2 = vector.multi_reduction <maximumf>, %1, %cst [1] : vector<32x128xf32> to vector<32xf32>
    %3 = vector.shape_cast %2 : vector<32xf32> to vector<32x1xf32>
    %cst_2 = arith.constant dense<0.000000e+00> : vector<32xf32>
    %4 = vector.multi_reduction <add>, %1, %cst_2 [1] : vector<32x128xf32> to vector<32xf32>
    %5 = vector.shape_cast %4 : vector<32xf32> to vector<32x1xf32>
    %c0_i32 = arith.constant 0 : i32
    %6 = arith.cmpi eq, %arg2, %c0_i32 : i32
    %7 = arith.extui %6 : i1 to i32
    %c0_i32_3 = arith.constant 0 : i32
    %8 = arith.cmpi ne, %7, %c0_i32_3 : i32
    scf.if %8 {
      %c0_7 = arith.constant 0 : index
      %c0_8 = arith.constant 0 : index
      %15 = vector.load %arg6[%c0_7, %c0_8] : memref<32x1xf32, #tpu.memory_space<vmem>>, vector<32x1xf32>
      tpu.vector_store %arg6[%c0_7, %c0_8], %3 {strides = array<i32>} : memref<32x1xf32, #tpu.memory_space<vmem>>, vector<32x1xf32>,
      %c0_9 = arith.constant 0 : index
      %c0_10 = arith.constant 0 : index
      %16 = vector.load %arg7[%c0_9, %c0_10] : memref<32x1xf32, #tpu.memory_space<vmem>>, vector<32x1xf32>
      tpu.vector_store %arg7[%c0_9, %c0_10], %5 {strides = array<i32>} : memref<32x1xf32, #tpu.memory_space<vmem>>, vector<32x1xf32>,
    } else {
    }
    %c0_i32_4 = arith.constant 0 : i32
    %9 = arith.cmpi ne, %arg2, %c0_i32_4 : i32
    %10 = arith.extui %9 : i1 to i32
    %c0_i32_5 = arith.constant 0 : i32
    %11 = arith.cmpi ne, %10, %c0_i32_5 : i32
    scf.if %11 {
      %c0_7 = arith.constant 0 : index
      %c0_8 = arith.constant 0 : index
      %15 = vector.load %arg6[%c0_7, %c0_8] : memref<32x1xf32, #tpu.memory_space<vmem>>, vector<32x1xf32>
      %16 = arith.maximumf %15, %3 : vector<32x1xf32>
      %c0_9 = arith.constant 0 : index
      %c0_10 = arith.constant 0 : index
      %17 = vector.load %arg6[%c0_9, %c0_10] : memref<32x1xf32, #tpu.memory_space<vmem>>, vector<32x1xf32>
      tpu.vector_store %arg6[%c0_9, %c0_10], %16 {strides = array<i32>} : memref<32x1xf32, #tpu.memory_space<vmem>>, vector<32x1xf32>,
      %c0_11 = arith.constant 0 : index
      %c0_12 = arith.constant 0 : index
      %18 = vector.load %arg7[%c0_11, %c0_12] : memref<32x1xf32, #tpu.memory_space<vmem>>, vector<32x1xf32>
      %19 = arith.addf %18, %5 : vector<32x1xf32>
      %c0_13 = arith.constant 0 : index
      %c0_14 = arith.constant 0 : index
      %20 = vector.load %arg7[%c0_13, %c0_14] : memref<32x1xf32, #tpu.memory_space<vmem>>, vector<32x1xf32>
      tpu.vector_store %arg7[%c0_13, %c0_14], %19 {strides = array<i32>} : memref<32x1xf32, #tpu.memory_space<vmem>>, vector<32x1xf32>,
    } else {
    }
    %c1_i32 = arith.constant 1 : i32
    %12 = arith.cmpi eq, %arg2, %c1_i32 : i32
    %13 = arith.extui %12 : i1 to i32
    %c0_i32_6 = arith.constant 0 : i32
    %14 = arith.cmpi ne, %13, %c0_i32_6 : i32
    scf.if %14 {
      %c0_7 = arith.constant 0 : index
      %c0_8 = arith.constant 0 : index
      %15 = vector.load %arg6[%c0_7, %c0_8] : memref<32x1xf32, #tpu.memory_space<vmem>>, vector<32x1xf32>
      %c0_9 = arith.constant 0 : index
      %c0_10 = arith.constant 0 : index
      %c0_11 = arith.constant 0 : index
      %16 = vector.load %arg4[%c0_9, %c0_10, %c0_11] : memref<1x32x1xf32, #tpu.memory_space<vmem>>, vector<1x32x1xf32>
      %17 = vector.shape_cast %16 : vector<1x32x1xf32> to vector<32x1xf32>
      %18 = vector.shape_cast %15 : vector<32x1xf32> to vector<1x32x1xf32>
      tpu.vector_store %arg4[%c0_9, %c0_10, %c0_11], %18 {strides = array<i32>} : memref<1x32x1xf32, #tpu.memory_space<vmem>>, vector<1x32x1xf32>,
      %c0_12 = arith.constant 0 : index
      %c0_13 = arith.constant 0 : index
      %19 = vector.load %arg7[%c0_12, %c0_13] : memref<32x1xf32, #tpu.memory_space<vmem>>, vector<32x1xf32>
      %cst_14 = arith.constant 3.906250e-03 : f32
      %20 = vector.broadcast %cst_14 : f32 to vector<32x1xf32>
      %21 = arith.mulf %19, %20 : vector<32x1xf32>
      %c0_15 = arith.constant 0 : index
      %c0_16 = arith.constant 0 : index
      %c0_17 = arith.constant 0 : index
      %22 = vector.load %arg5[%c0_15, %c0_16, %c0_17] : memref<1x32x1xf32, #tpu.memory_space<vmem>>, vector<1x32x1xf32>
      %23 = vector.shape_cast %22 : vector<1x32x1xf32> to vector<32x1xf32>
      %24 = vector.shape_cast %21 : vector<32x1xf32> to vector<1x32x1xf32>
      tpu.vector_store %arg5[%c0_15, %c0_16, %c0_17], %24 {strides = array<i32>} : memref<1x32x1xf32, #tpu.memory_space<vmem>>, vector<1x32x1xf32>,
    } else {
    }
    return
  }
  func.func @transform_0(%arg0: i32, %arg1: i32, %arg2: i32) -> (i32, i32, i32) {
    %c0_i32 = arith.constant 0 : i32
    return %arg0, %arg1, %arg2 : i32, i32, i32
  }
  func.func @transform_1(%arg0: i32, %arg1: i32, %arg2: i32) -> (i32, i32, i32) {
    %c0_i32 = arith.constant 0 : i32
    %c0_i32_0 = arith.constant 0 : i32
    return %arg0, %arg1, %c0_i32 : i32, i32, i32
  }
  func.func @transform_2(%arg0: i32, %arg1: i32, %arg2: i32) -> (i32, i32, i32) {
    %c0_i32 = arith.constant 0 : i32
    %c0_i32_0 = arith.constant 0 : i32
    return %arg0, %arg1, %c0_i32 : i32, i32, i32
  }
}

</mosaic_0001>

<llo_original>
// kernel: tpu_custom_call.1
$region0: #{tpu_custom_call.1}
  #allocation0 [shape = 'u32[]', space=smem, size = 0x4, offset = 0x4, fixed_abs, tag = 'smem constant byte address 0x4 - core index']
  #allocation1 [shape = 'u32[144,128]{1,0:T(1,128)}', space=vmem, size = 0x12000, scoped, tag = 'internal scratch']
  #allocation2 [shape = 'f32[32,1]{1,0:T(8,128)}', space=vmem, size = 0x4000, scoped, tag = 'scratch operand']
  #allocation3 [shape = 'f32[32,1]{1,0:T(8,128)}', space=vmem, size = 0x4000, scoped, tag = 'scratch operand']
  %s0 = inlined_call_operand.hbm [shape: f32[2,32,256], index: 0, kind: input, shape index: {}]
  %s1 = inlined_call_operand.vmem [shape: f32[2,32,1], index: 1, kind: output, shape index: {0}]
  %s2 = inlined_call_operand.vmem [shape: f32[2,32,1], index: 2, kind: output, shape index: {1}]
  %3 = xla_tuple %s1, %s2
  %s4 = sld [smem:[#allocation0]]
  $region61: #{tpu_custom_call.1} parent=0
    _
  %s6 = ssub.s32 1, %s4
  %s7 = scalar_select 0, %s6, %s4
  $region1: #{tpu_custom_call.1} parent=0
    #allocation4 [shape = 'u8[32768]{0}', space=vmem, size = 0x8000, scoped, tag = 'input window, operand 0']
    #allocation5 [shape = 's32[2]{0}', space=sflag, size = 0x8, scoped, tag = 'scoped memory for tpu_custom_call.1']
    %8 = vsyncpa [#allocation5], 0
    %s9 = scalar_lea.sflag [#allocation5], 1
    %10 = vsyncpa %s9, 0
    loop: start=0, step=1, limit=6
    $region2: #{tpu_custom_call.1} parent=1 // loop_pre_header
      _
    $region3: #{tpu_custom_call.1} parent=1 // loop_header
      %s12 = sphi 0, %s16
      %p13 = scmp.ge.s32.totalorder %s12, 6
      %s19 = sphi 0, %s38
      %s20 = sphi 0, %s34
      %s21 = sphi 0, %s30
      %s22 = sphi 0, %s19
      %s23 = sphi 0, %s20
      %s24 = sphi 0, %s21
      %s25 = sphi 0, %s22
      %s26 = sphi 0, %s23
      %s27 = sphi 0, %s24
      %s45 = sphi 0, %s47
      %s48 = sphi 0, %s45
      %s49 = sphi 0, %s48
      %s65 = sphi 0, %s49
      %s73 = sphi 0, %s75
      %s76 = sphi 0, %s73
      %s77 = sphi 0, %s76
      %s93 = sphi 0, %s77
      %s101 = sphi 0, %s103
      %s104 = sphi 0, %s101
      %s105 = sphi 0, %s104
      %s121 = sphi 0, %s105
    $region4: #{tpu_custom_call.1} parent=1 // loop_header_branch
      %15 = sbr.rel (%p13) target = $region8
    $region5: #{tpu_custom_call.1} parent=1 // loop_body
      %s17 = ssub.s32 %s12, 1
      %s18 = ssub.s32 %s12, 2
      %s28 = sadd.s32 1, %s21
      %p29 = scmp.ge.s32.totalorder %s28, 2
      %s30 = scalar_select %p29, 0, %s28
      %s31 = sadd.s32 1, %s20
      %s32 = scalar_select %p29, %s31, %s20
      %p33 = scmp.ge.s32.totalorder %s32, 1
      %s34 = scalar_select %p33, 0, %s32
      %s35 = sadd.s32 1, %s19
      %s36 = scalar_select %p33, %s35, %s19
      %p37 = scmp.ge.s32.totalorder %s36, 2
      %s38 = scalar_select %p37, 0, %s36
      %s39 = ssub.s32 %s19, %s38
      %s40 = ssub.s32 %s20, %s34
      %s41 = sor.u32 %s39, %s40
      %s42 = ssub.s32 %s21, %s30
      %s43 = sor.u32 %s41, %s42
      %p44 = scmp.eq.s32.totalorder %s43, 0
      %s46 = sadd.s32 %s45, 1
      %s47 = scalar_select %p44, %s45, %s46
      %p50 = pneg %p44
      %p51 = scmp.eq.s32.totalorder %s12, 3
      %p52 = por %p50, %p51
      %p53 = scmp.ne.s32.totalorder %s45, %s48
      %p54 = scmp.eq.s32.totalorder %s12, 0
      %p55 = por %p53, %p54
      %p56 = scmp.ne.s32.totalorder %s45, %s48
      %p57 = scmp.eq.s32.totalorder %s17, 3
      %p58 = por %p56, %p57
      %p59 = scmp.ne.s32.totalorder %s48, %s49
      %p60 = scmp.eq.s32.totalorder %s17, 0
      %p61 = por %p59, %p60
      %p62 = scmp.ne.s32.totalorder %s48, %s49
      %p63 = scmp.eq.s32.totalorder %s18, 3
      %p64 = por %p62, %p63
      %p66 = scmp.ne.s32.totalorder %s49, %s65
      %p67 = scmp.eq.s32.totalorder %s18, 0
      %p68 = por %p66, %p67
      %s69 = ssub.s32 %s19, %s38
      %s70 = ssub.s32 %s20, %s34
      %s71 = sor.u32 %s69, %s70
      %p72 = scmp.eq.s32.totalorder %s71, 0
      %s74 = sadd.s32 %s73, 1
      %s75 = scalar_select %p72, %s73, %s74
      %p78 = pneg %p72
      %p79 = scmp.eq.s32.totalorder %s12, 3
      %p80 = por %p78, %p79
      %p81 = scmp.ne.s32.totalorder %s73, %s76
      %p82 = scmp.eq.s32.totalorder %s12, 0
      %p83 = por %p81, %p82
      %p84 = scmp.ne.s32.totalorder %s73, %s76
      %p85 = scmp.eq.s32.totalorder %s17, 3
      %p86 = por %p84, %p85
      %p87 = scmp.ne.s32.totalorder %s76, %s77
      %p88 = scmp.eq.s32.totalorder %s17, 0
      %p89 = por %p87, %p88
      %p90 = scmp.ne.s32.totalorder %s76, %s77
      %p91 = scmp.eq.s32.totalorder %s18, 3
      %p92 = por %p90, %p91
      %p94 = scmp.ne.s32.totalorder %s77, %s93
      %p95 = scmp.eq.s32.totalorder %s18, 0
      %p96 = por %p94, %p95
      %s97 = ssub.s32 %s19, %s38
      %s98 = ssub.s32 %s20, %s34
      %s99 = sor.u32 %s97, %s98
      %p100 = scmp.eq.s32.totalorder %s99, 0
      %s102 = sadd.s32 %s101, 1
      %s103 = scalar_select %p100, %s101, %s102
      %p106 = pneg %p100
      %p107 = scmp.eq.s32.totalorder %s12, 3
      %p108 = por %p106, %p107
      %p109 = scmp.ne.s32.totalorder %s101, %s104
      %p110 = scmp.eq.s32.totalorder %s12, 0
      %p111 = por %p109, %p110
      %p112 = scmp.ne.s32.totalorder %s101, %s104
      %p113 = scmp.eq.s32.totalorder %s17, 3
      %p114 = por %p112, %p113
      %p115 = scmp.ne.s32.totalorder %s104, %s105
      %p116 = scmp.eq.s32.totalorder %s17, 0
      %p117 = por %p115, %p116
      %p118 = scmp.ne.s32.totalorder %s104, %s105
      %p119 = scmp.eq.s32.totalorder %s18, 3
      %p120 = por %p118, %p119
      %p122 = scmp.ne.s32.totalorder %s105, %s121
      %p123 = scmp.eq.s32.totalorder %s18, 0
      %p124 = por %p122, %p123
      %p125 = scmp.le.s32.totalorder 1, %s12
      %p126 = scmp.lt.s32.totalorder %s12, 5
      %p127 = pnand %p125, %p126
      %p128 = pneg %p127
      // Predicated region
      $region9: #{tpu_custom_call.1} parent=5 // pred_check
        _
      $region10: #{tpu_custom_call.1} parent=5 // pred_check_branch
        %130 = sbr.rel (%p127) target = $region12
      $region11: #{tpu_custom_call.1} parent=5 // pred_region
        %s131 = ssub.s32 %s12, 1
      $region12: #{tpu_custom_call.1} parent=5 // pred_fallthru
        _
      %p132 = scmp.lt.s32.totalorder %s12, 4
      // Predicated region
      $region13: #{tpu_custom_call.1} parent=5 // pred_check
        %p133 = pneg %p132
      $region14: #{tpu_custom_call.1} parent=5 // pred_check_branch
        %135 = sbr.rel (%p133) target = $region16
      $region15: #{tpu_custom_call.1} parent=5 // pred_region
        // Predicated region
        $region17: #{tpu_custom_call.1} parent=15 // pred_check
          %p136 = pneg %p55
        $region18: #{tpu_custom_call.1} parent=15 // pred_check_branch
          %138 = sbr.rel (%p136) target = $region20
        $region19: #{tpu_custom_call.1} parent=15 // pred_region
          %s139 = sand.u32 %s45, 1
          %s140 = scalar_lea.sflag [#allocation5], %s139
          %s141 = sand.u32 %s45, 1
          %s142 = smul.addr %s141, 32
          %s143 = scalar_lea.vmem [#allocation4], %s142
          %s144 = smul.u32 4, %s20
          %s146 = ssub.s32 512, 512
          %147 = vsyncadd %s140, %s146
          %s148 = smul.addr %s144, 2
          %s149 = sadd.s32 %s21, %s148
          %s150 = smul.addr %s19, 8
          %s151 = sadd.s32 %s149, %s150
          %s152 = smul.addr %s151, 128
          %s153 = scalar_lea.hbm %s0, %s152
          %s154 = sshll.u32 %s143, 4
          %s155 = int_to_ptr.vmem [resolvable:$true] %s154
          %160 = dma.hbm_to_vmem [thread:$0]  %s153, 512, %s155, %s140, 256, 128, 8
        $region20: #{tpu_custom_call.1} parent=15 // pred_fallthru
          _
      $region16: #{tpu_custom_call.1} parent=5 // pred_fallthru
        _
      %p161 = scmp.le.s32.totalorder 1, %s12
      %p162 = scmp.lt.s32.totalorder %s12, 5
      %p163 = pnand %p161, %p162
      %p164 = pneg %p163
      // Predicated region
      $region21: #{tpu_custom_call.1} parent=5 // pred_check
        _
      $region22: #{tpu_custom_call.1} parent=5 // pred_check_branch
        %166 = sbr.rel (%p163) target = $region24
      $region23: #{tpu_custom_call.1} parent=5 // pred_region
        %s167 = ssub.s32 %s12, 1
        %s168 = sand.u32 %s48, 1
        %s169 = scalar_lea.sflag [#allocation5], %s168
        %s170 = sand.u32 %s48, 1
        %s171 = smul.addr %s170, 32
        %s172 = scalar_lea.vmem [#allocation4], %s171
        // Predicated region
        $region25: #{tpu_custom_call.1} parent=23 // pred_check
          %p173 = pneg %p61
        $region26: #{tpu_custom_call.1} parent=23 // pred_check_branch
          %175 = sbr.rel (%p173) target = $region28
        $region27: #{tpu_custom_call.1} parent=23 // pred_region
          %176 = dma.done %s169, 512
        $region28: #{tpu_custom_call.1} parent=23 // pred_fallthru
          _
        %s177 = sand.u32 %s48, 1
        %s178 = scalar_lea.sflag [#allocation5], %s177
        %s179 = sand.u32 %s48, 1
        %s180 = smul.addr %s179, 32
        %s181 = scalar_lea.vmem [#allocation4], %s180
        %p182 = pneg %p61
        %p183 = pneg %p58
        %p184 = pneg %p89
        %p185 = pneg %p86
        %s186 = smul.u32 4, %s23
        %p187 = scmp.lt.s32.totalorder %s22, 1
        %s188 = scalar_select %p187, %s22, 1
        %p189 = scmp.lt.s32.totalorder %s186, 3
        %s190 = scalar_select %p189, %s186, 3
        %s191 = smul.addr %s188, 4
        %s192 = sadd.s32 %s190, %s191
        %s193 = smul.addr %s192, 8
        %s194 = scalar_lea.vmem %s1, %s193
        %p195 = pneg %p117
        %p196 = pneg %p114
        %s197 = smul.u32 4, %s23
        %p198 = scmp.lt.s32.totalorder %s22, 1
        %s199 = scalar_select %p198, %s22, 1
        %p200 = scmp.lt.s32.totalorder %s197, 3
        %s201 = scalar_select %p200, %s197, 3
        %s202 = smul.addr %s199, 4
        %s203 = sadd.s32 %s201, %s202
        %s204 = smul.addr %s203, 8
        %s205 = scalar_lea.vmem %s2, %s204
        %s206 = smul.u32 4, %s23
        %s207 = smul.u32 4, %s23
        %p208 = scmp.lt.s32.totalorder %s22, 1
        %s209 = scalar_select %p208, %s22, 1
        %p210 = scmp.lt.s32.totalorder %s207, 3
        %s211 = scalar_select %p210, %s207, 3
        %s212 = smul.addr %s209, 4
        %s213 = sadd.s32 %s211, %s212
        %s214 = smul.addr %s213, 8
        %s215 = scalar_lea.vmem %s1, %s214
        %s216 = smul.u32 4, %s23
        %s217 = smul.u32 4, %s23
        %p218 = scmp.lt.s32.totalorder %s22, 1
        %s219 = scalar_select %p218, %s22, 1
        %p220 = scmp.lt.s32.totalorder %s217, 3
        %s221 = scalar_select %p220, %s217, 3
        %s222 = smul.addr %s219, 4
        %s223 = sadd.s32 %s221, %s222
        %s224 = smul.addr %s223, 8
        %s225 = scalar_lea.vmem %s2, %s224
        %s226 = smul.u32 4, %s23
        %v227 = vld [vmem:[%s172] sm:$0xff]
        %v228 = vld [vmem:[%s172 + $0x8] sm:$0xff]
        %v229 = vld [vmem:[%s172 + $0x10] sm:$0xff]
        %v230 = vld [vmem:[%s172 + $0x18] sm:$0xff]
        %231 = vmax.xlane.f32.xlu0 %v227
        %v232 = vpop.xlane.xlu0 %231
        %233 = vmax.xlane.f32.xlu0 %v228
        %v234 = vpop.xlane.xlu0 %233
        %235 = vmax.xlane.f32.xlu0 %v229
        %v236 = vpop.xlane.xlu0 %235
        %237 = vmax.xlane.f32.xlu0 %v230
        %v238 = vpop.xlane.xlu0 %237
        %239 = vadd.xlane.f32.xlu0 %v227
        %v240 = vpop.xlane.xlu0 %239
        %241 = vadd.xlane.f32.xlu0 %v228
        %v242 = vpop.xlane.xlu0 %241
        %243 = vadd.xlane.f32.xlu0 %v229
        %v244 = vpop.xlane.xlu0 %243
        %245 = vadd.xlane.f32.xlu0 %v230
        %v246 = vpop.xlane.xlu0 %245
        %p247 = scmp.eq.s32.totalorder %s24, 0
        // Predicated region
        $region29: #{tpu_custom_call.1} parent=23 // pred_check
          %p248 = pneg %p247
        $region30: #{tpu_custom_call.1} parent=23 // pred_check_branch
          %250 = sbr.rel (%p248) target = $region32
        $region31: #{tpu_custom_call.1} parent=23 // pred_region
          %vm251 = vcmask 7168
          %252 = vst.msk [vmem:[#allocation2] sm:$0xff] %vm251, %v232
          %253 = vst.msk [vmem:[#allocation2 + $0x8] sm:$0xff] %vm251, %v234
          %254 = vst.msk [vmem:[#allocation2 + $0x10] sm:$0xff] %vm251, %v236
          %255 = vst.msk [vmem:[#allocation2 + $0x18] sm:$0xff] %vm251, %v238
          %256 = vst.msk [vmem:[#allocation3] sm:$0xff] %vm251, %v240
          %257 = vst.msk [vmem:[#allocation3 + $0x8] sm:$0xff] %vm251, %v242
          %258 = vst.msk [vmem:[#allocation3 + $0x10] sm:$0xff] %vm251, %v244
          %259 = vst.msk [vmem:[#allocation3 + $0x18] sm:$0xff] %vm251, %v246
        $region32: #{tpu_custom_call.1} parent=23 // pred_fallthru
          _
        %p260 = scmp.ne.s32.totalorder %s24, 0
        // Predicated region
        $region33: #{tpu_custom_call.1} parent=23 // pred_check
          %p261 = pneg %p260
        $region34: #{tpu_custom_call.1} parent=23 // pred_check_branch
          %263 = sbr.rel (%p261) target = $region36
        $region35: #{tpu_custom_call.1} parent=23 // pred_region
          %v264 = vld [vmem:[#allocation2] sm:$0xff]
          %v265 = vld [vmem:[#allocation2 + $0x8] sm:$0xff]
          %v266 = vld [vmem:[#allocation2 + $0x10] sm:$0xff]
          %v267 = vld [vmem:[#allocation2 + $0x18] sm:$0xff]
          %v268 = vmax.f32 %v264, %v232
          %v269 = vmax.f32 %v265, %v234
          %v270 = vmax.f32 %v266, %v236
          %v271 = vmax.f32 %v267, %v238
          %vm272 = vcmask 7168
          %273 = vst.msk [vmem:[#allocation2] sm:$0xff] %vm272, %v268
          %274 = vst.msk [vmem:[#allocation2 + $0x8] sm:$0xff] %vm272, %v269
          %275 = vst.msk [vmem:[#allocation2 + $0x10] sm:$0xff] %vm272, %v270
          %276 = vst.msk [vmem:[#allocation2 + $0x18] sm:$0xff] %vm272, %v271
          %v277 = vld [vmem:[#allocation3] sm:$0xff]
          %v278 = vld [vmem:[#allocation3 + $0x8] sm:$0xff]
          %v279 = vld [vmem:[#allocation3 + $0x10] sm:$0xff]
          %v280 = vld [vmem:[#allocation3 + $0x18] sm:$0xff]
          %v281 = vadd.f32 %v277, %v240
          %v282 = vadd.f32 %v278, %v242
          %v283 = vadd.f32 %v279, %v244
          %v284 = vadd.f32 %v280, %v246
          %285 = vst.msk [vmem:[#allocation3] sm:$0xff] %vm272, %v281
          %286 = vst.msk [vmem:[#allocation3 + $0x8] sm:$0xff] %vm272, %v282
          %287 = vst.msk [vmem:[#allocation3 + $0x10] sm:$0xff] %vm272, %v283
          %288 = vst.msk [vmem:[#allocation3 + $0x18] sm:$0xff] %vm272, %v284
        $region36: #{tpu_custom_call.1} parent=23 // pred_fallthru
          _
        %p289 = scmp.eq.s32.totalorder %s24, 1
        // Predicated region
        $region37: #{tpu_custom_call.1} parent=23 // pred_check
          %p290 = pneg %p289
        $region38: #{tpu_custom_call.1} parent=23 // pred_check_branch
          %292 = sbr.rel (%p290) target = $region40
        $region39: #{tpu_custom_call.1} parent=23 // pred_region
          %v293 = vld [vmem:[#allocation2] sm:$0xff]
          %v294 = vld [vmem:[#allocation2 + $0x8] sm:$0xff]
          %v295 = vld [vmem:[#allocation2 + $0x10] sm:$0xff]
          %v296 = vld [vmem:[#allocation2 + $0x18] sm:$0xff]
          %vm297 = vcmask 7168
          %298 = vst.msk [vmem:[%s215] sm:$0xff] %vm297, %v293
          %299 = vst.msk [vmem:[%s215 + $0x8] sm:$0xff] %vm297, %v294
          %300 = vst.msk [vmem:[%s215 + $0x10] sm:$0xff] %vm297, %v295
          %301 = vst.msk [vmem:[%s215 + $0x18] sm:$0xff] %vm297, %v296
          %v302 = vld [vmem:[#allocation3] sm:$0xff]
          %v303 = vld [vmem:[#allocation3 + $0x8] sm:$0xff]
          %v304 = vld [vmem:[#allocation3 + $0x10] sm:$0xff]
          %v305 = vld [vmem:[#allocation3 + $0x18] sm:$0xff]
          %v306 = vmul.f32 %v302, 0.00390625
          %v307 = vmul.f32 %v303, 0.00390625
          %v308 = vmul.f32 %v304, 0.00390625
          %v309 = vmul.f32 %v305, 0.00390625
          %310 = vst.msk [vmem:[%s225] sm:$0xff] %vm297, %v306
          %311 = vst.msk [vmem:[%s225 + $0x8] sm:$0xff] %vm297, %v307
          %312 = vst.msk [vmem:[%s225 + $0x10] sm:$0xff] %vm297, %v308
          %313 = vst.msk [vmem:[%s225 + $0x18] sm:$0xff] %vm297, %v309
        $region40: #{tpu_custom_call.1} parent=23 // pred_fallthru
          _
        %s314 = smul.u32 4, %s23
        %p315 = scmp.lt.s32.totalorder %s22, 1
        %s316 = scalar_select %p315, %s22, 1
        %p317 = scmp.lt.s32.totalorder %s314, 3
        %s318 = scalar_select %p317, %s314, 3
        %s319 = smul.addr %s316, 4
        %s320 = sadd.s32 %s318, %s319
        %s321 = smul.addr %s320, 8
        %s322 = scalar_lea.vmem %s1, %s321
        %s323 = smul.u32 4, %s23
        %p324 = scmp.lt.s32.totalorder %s22, 1
        %s325 = scalar_select %p324, %s22, 1
        %p326 = scmp.lt.s32.totalorder %s323, 3
        %s327 = scalar_select %p326, %s323, 3
        %s328 = smul.addr %s325, 4
        %s329 = sadd.s32 %s327, %s328
        %s330 = smul.addr %s329, 8
        %s331 = scalar_lea.vmem %s2, %s330
        // Predicated region
        $region41: #{tpu_custom_call.1} parent=23 // pred_check
          %p332 = pneg %p86
        $region42: #{tpu_custom_call.1} parent=23 // pred_check_branch
          %334 = sbr.rel (%p332) target = $region44
        $region43: #{tpu_custom_call.1} parent=23 // pred_region
          %s335 = smul.u32 4, %s23
        $region44: #{tpu_custom_call.1} parent=23 // pred_fallthru
          _
        // Predicated region
        $region45: #{tpu_custom_call.1} parent=23 // pred_check
          %p336 = pneg %p114
        $region46: #{tpu_custom_call.1} parent=23 // pred_check_branch
          %338 = sbr.rel (%p336) target = $region48
        $region47: #{tpu_custom_call.1} parent=23 // pred_region
          %s339 = smul.u32 4, %s23
        $region48: #{tpu_custom_call.1} parent=23 // pred_fallthru
          _
      $region24: #{tpu_custom_call.1} parent=5 // pred_fallthru
        _
      %p340 = scmp.le.s32.totalorder 2, %s12
      // Predicated region
      $region49: #{tpu_custom_call.1} parent=5 // pred_check
        %p341 = pneg %p340
      $region50: #{tpu_custom_call.1} parent=5 // pred_check_branch
        %343 = sbr.rel (%p341) target = $region52
      $region51: #{tpu_custom_call.1} parent=5 // pred_region
        %s344 = ssub.s32 %s12, 2
        // Predicated region
        $region53: #{tpu_custom_call.1} parent=51 // pred_check
          %p345 = pneg %p92
        $region54: #{tpu_custom_call.1} parent=51 // pred_check_branch
          %347 = sbr.rel (%p345) target = $region56
        $region55: #{tpu_custom_call.1} parent=51 // pred_region
          %s348 = smul.u32 4, %s26
          %p349 = scmp.lt.s32.totalorder %s25, 1
          %s350 = scalar_select %p349, %s25, 1
          %p351 = scmp.lt.s32.totalorder %s348, 3
          %s352 = scalar_select %p351, %s348, 3
          %s353 = smul.addr %s350, 4
          %s354 = sadd.s32 %s352, %s353
          %s355 = smul.addr %s354, 8
          %s356 = scalar_lea.vmem %s1, %s355
        $region56: #{tpu_custom_call.1} parent=51 // pred_fallthru
          _
        // Predicated region
        $region57: #{tpu_custom_call.1} parent=51 // pred_check
          %p357 = pneg %p120
        $region58: #{tpu_custom_call.1} parent=51 // pred_check_branch
          %359 = sbr.rel (%p357) target = $region60
        $region59: #{tpu_custom_call.1} parent=51 // pred_region
          %s360 = smul.u32 4, %s26
          %p361 = scmp.lt.s32.totalorder %s25, 1
          %s362 = scalar_select %p361, %s25, 1
          %p363 = scmp.lt.s32.totalorder %s360, 3
          %s364 = scalar_select %p363, %s360, 3
          %s365 = smul.addr %s362, 4
          %s366 = sadd.s32 %s364, %s365
          %s367 = smul.addr %s366, 8
          %s368 = scalar_lea.vmem %s2, %s367
        $region60: #{tpu_custom_call.1} parent=51 // pred_fallthru
          _
      $region52: #{tpu_custom_call.1} parent=5 // pred_fallthru
        _
    $region6: #{tpu_custom_call.1} parent=1 // loop_footer
      %s16 = sadd.s32 1, %s12
    $region7: #{tpu_custom_call.1} parent=1 // loop_footer_branch
      %11 = sbr.rel target = $region3
    $region8: #{tpu_custom_call.1} parent=1 // loop_exit
      _
    %369 = vsyncpa [#allocation5], 1
    %s370 = scalar_lea.sflag [#allocation5], 1
    %371 = vsyncpa %s370, 1

</llo_original>
